<compile_context>
chip_gen: v6e
topology: v6e:2x2x1
jax: 0.10.0
libtpu: 0.0.40
codegen_flags: <defaults>
</compile_context>

<pallas_src>
import jax
import jax.numpy as jnp
from jax.experimental import pallas as pl
from jax.experimental.pallas import tpu as pltpu


def _dc_kernel(x_ref, k_ref, m_ref, o_ref):
    # x/k/o: (1, tc, D); m: (1, tc, D) or (1, 1, D) (broadcast over channels).
    x = x_ref[...]
    k = k_ref[...]
    m = m_ref[...].astype(x.dtype)
    # o = m*k + (1-m)*x, rewritten with one fewer multiply and no (1-m) temp.
    o_ref[...] = x + m * (k - x)


def _choose_channel_tile(C, D, itemsize, target_bytes=1 << 20):
    """Largest legal channel tile whose (tc, D) data block is <= target_bytes.

    Legal tc values: == C (full extent) or a multiple of 8 that divides C
    (the (8, 128) BlockSpec rule on the second-to-last block dim).
    """
    if C * D * itemsize <= target_bytes:
        return C
    fitting = [tc for tc in range(8, C, 8)
               if C % tc == 0 and tc * D * itemsize <= target_bytes]
    if fitting:
        return max(fitting)
    # Fallback: smallest legal tile even if it exceeds the soft target.
    return 8 if C % 8 == 0 else C


def _hard_data_consistency(x, kspace, mask):
    """Pallas hot path: out = mask*kspace + (1-mask)*x, elementwise.

    x, kspace: (B, C, H, W)
    mask:      (B, Cm, Hm, W) with Cm in {1, C}, Hm in {1, H} (broadcastable)
    """
    B, C, H, W = x.shape
    D = H * W                      # lane axis (multiple of 128 -> dense vst)
    Cm = mask.shape[1]

    xf = x.reshape(B, C, D)
    kf = kspace.reshape(B, C, D)
    # Materialize only the cheap per-batch H-broadcast so the kernel sees the
    # lane-dense H*W axis; the channel broadcast stays virtual (index_map).
    mf = jnp.broadcast_to(mask, (B, Cm, H, W)).reshape(B, Cm, D)

    tc = _choose_channel_tile(C, D, x.dtype.itemsize)
    grid = (B, C // tc)

    data_block = (1, tc, D)
    data_map = lambda b, c: (b, c, 0)
    if Cm == C:
        mask_block, mask_map = (1, tc, D), (lambda b, c: (b, c, 0))
    else:
        mask_block, mask_map = (1, 1, D), (lambda b, c: (b, 0, 0))

    # Pipeline footprint: 2 buffers x (x + k + out + mask) tiles. Stay inside
    # the scoped-VMEM defaults (v5e 16 MiB, v6e/v7x 32 MiB); only raise the
    # limit if the fallback tile is unavoidably large.
    tile_bytes = tc * D * x.dtype.itemsize
    mask_bytes = (tc if Cm == C else 1) * D * mf.dtype.itemsize
    footprint = 2 * (3 * tile_bytes + mask_bytes)
    params = dict(dimension_semantics=("parallel", "parallel"))
    if footprint > 12 * 1024 * 1024:
        params["vmem_limit_bytes"] = min(2 * footprint, 48 * 1024 * 1024)

    out = pl.pallas_call(
        _dc_kernel,
        out_shape=jax.ShapeDtypeStruct((B, C, D), x.dtype),
        grid_spec=pl.GridSpec(
            grid=grid,
            in_specs=[
                pl.BlockSpec(data_block, data_map),
                pl.BlockSpec(data_block, data_map),
                pl.BlockSpec(mask_block, mask_map),
            ],
            out_specs=pl.BlockSpec(data_block, data_map),
        ),
        compiler_params=pltpu.CompilerParams(**params),
    )(xf, kf, mf)
    return out.reshape(B, C, H, W)


# ---- the two callables the PyTorch module is constructed with ---------------

def mask_func(kspace, mask):
    # identity: mask already matches the k-space sampling pattern
    return mask


def data_consistency_func(x, kspace, mask):
    return _hard_data_consistency(x, kspace, mask)


# ---- DataConsistency.forward equivalent --------------------------------------

def data_consistency_forward(x, kspace, mask):
    """Mirrors DataConsistency.forward.

    x, kspace: (B, C, H, W); mask: lower-rank sampling mask (e.g. (B, W)).
    """
    # unsqueeze at dim 1 until ndims match (same loop as the torch code)
    if mask.ndim != kspace.ndim:
        difference = kspace.ndim - mask.ndim
        for _ in range(mask.ndim):
            mask = jnp.expand_dims(mask, 1)
            difference -= 1
            if difference == 0:
                break
    # torch repeats the mask along channels here; mask_func is identity and
    # the DC blend broadcasts over channels, so we keep that dim virtual
    # (saves a C-times mask materialization and C-times mask HBM reads).
    mask = mask_func(kspace, mask)
    return data_consistency_func(x, kspace, mask)


if __name__ == "__main__":
    key = jax.random.PRNGKey(0)
    k1, k2, k3 = jax.random.split(key, 3)

    B, C, H, W = 2, 4, 16, 16
    x = jax.random.normal(k1, (B, C, H, W), dtype=jnp.float32)
    kspace = jax.random.normal(k2, (B, C, H, W), dtype=jnp.float32)
    # sampling mask over the readout/phase-encode dim (B, W), binary
    mask = (jax.random.uniform(k3, (B, W)) > 0.5).astype(jnp.float32)

    out = data_consistency_forward(x, kspace, mask)
    jax.block_until_ready(out)

    # sanity check against a pure-JAX reference (with the explicit repeat)
    m4 = jnp.tile(mask[:, None, None, :], (1, C, 1, 1))
    ref = m4 * kspace + (1.0 - m4) * x
    assert out.shape == x.shape
    assert jnp.allclose(out, ref, atol=1e-6), "mismatch vs reference"

    print("KERNEL_OK")
</pallas_src>

<mosaic_0001>
module attributes {stable_mosaic.version = 11 : i64} {
  func.func @_dc_kernel(%arg0: i32, %arg1: i32, %arg2: memref<1x4x256xf32, #tpu.memory_space<vmem>>, %arg3: memref<1x4x256xf32, #tpu.memory_space<vmem>>, %arg4: memref<1x1x256xf32, #tpu.memory_space<vmem>>, %arg5: memref<1x4x256xf32, #tpu.memory_space<vmem>>) attributes {dimension_semantics = [#tpu.dimension_semantics<parallel>, #tpu.dimension_semantics<parallel>], iteration_bounds = array<i64: 2, 1>, scalar_prefetch = 0 : i64, scratch_operands = 0 : i64, tpu.core_type = #tpu.core_type<tc>, window_params = [{transform_indices = @transform_0, window_bounds = array<i64: 1, 4, 256>}, {transform_indices = @transform_1, window_bounds = array<i64: 1, 4, 256>}, {transform_indices = @transform_2, window_bounds = array<i64: 1, 1, 256>}, {transform_indices = @transform_3, window_bounds = array<i64: 1, 4, 256>}]} {
    %c0 = arith.constant 0 : index
    %c0_0 = arith.constant 0 : index
    %c0_1 = arith.constant 0 : index
    %0 = vector.load %arg2[%c0, %c0_0, %c0_1] : memref<1x4x256xf32, #tpu.memory_space<vmem>>, vector<1x4x256xf32>
    %c0_2 = arith.constant 0 : index
    %c0_3 = arith.constant 0 : index
    %c0_4 = arith.constant 0 : index
    %1 = vector.load %arg3[%c0_2, %c0_3, %c0_4] : memref<1x4x256xf32, #tpu.memory_space<vmem>>, vector<1x4x256xf32>
    %c0_5 = arith.constant 0 : index
    %c0_6 = arith.constant 0 : index
    %c0_7 = arith.constant 0 : index
    %2 = vector.load %arg4[%c0_5, %c0_6, %c0_7] : memref<1x1x256xf32, #tpu.memory_space<vmem>>, vector<1x1x256xf32>
    %3 = arith.subf %1, %0 : vector<1x4x256xf32>
    %4 = vector.broadcast %2 : vector<1x1x256xf32> to vector<1x4x256xf32>
    %5 = arith.mulf %4, %3 : vector<1x4x256xf32>
    %6 = arith.addf %0, %5 : vector<1x4x256xf32>
    %c0_8 = arith.constant 0 : index
    %c0_9 = arith.constant 0 : index
    %c0_10 = arith.constant 0 : index
    %7 = vector.load %arg5[%c0_8, %c0_9, %c0_10] : memref<1x4x256xf32, #tpu.memory_space<vmem>>, vector<1x4x256xf32>
    tpu.vector_store %arg5[%c0_8, %c0_9, %c0_10], %6 {strides = array<i32>} : memref<1x4x256xf32, #tpu.memory_space<vmem>>, vector<1x4x256xf32>,
    return
  }
  func.func @transform_0(%arg0: i32, %arg1: i32) -> (i32, i32, i32) {
    %c0_i32 = arith.constant 0 : i32
    %c0_i32_0 = arith.constant 0 : i32
    return %arg0, %arg1, %c0_i32 : i32, i32, i32
  }
  func.func @transform_1(%arg0: i32, %arg1: i32) -> (i32, i32, i32) {
    %c0_i32 = arith.constant 0 : i32
    %c0_i32_0 = arith.constant 0 : i32
    return %arg0, %arg1, %c0_i32 : i32, i32, i32
  }
  func.func @transform_2(%arg0: i32, %arg1: i32) -> (i32, i32, i32) {
    %c0_i32 = arith.constant 0 : i32
    %c0_i32_0 = arith.constant 0 : i32
    %c0_i32_1 = arith.constant 0 : i32
    return %arg0, %c0_i32, %c0_i32_0 : i32, i32, i32
  }
  func.func @transform_3(%arg0: i32, %arg1: i32) -> (i32, i32, i32) {
    %c0_i32 = arith.constant 0 : i32
    %c0_i32_0 = arith.constant 0 : i32
    return %arg0, %arg1, %c0_i32 : i32, i32, i32
  }
}

</mosaic_0001>

<llo_original>
// kernel: tpu_custom_call.1
$region0: #{tpu_custom_call.1}
  #allocation0 [shape = 'u32[]', space=smem, size = 0x4, offset = 0x4, fixed_abs, tag = 'smem constant byte address 0x4 - core index']
  #allocation1 [shape = 'u32[144,128]{1,0:T(1,128)}', space=vmem, size = 0x12000, scoped, tag = 'internal scratch']
  %s0 = inlined_call_operand.hbm [shape: f32[2,4,256], index: 0, kind: input, shape index: {}]
  %s1 = inlined_call_operand.hbm [shape: f32[2,4,256], index: 1, kind: input, shape index: {}]
  %s2 = inlined_call_operand.hbm [shape: f32[2,1,256], index: 2, kind: input, shape index: {}]
  %s3 = inlined_call_operand.hbm [shape: f32[2,4,256], index: 3, kind: output, shape index: {}]
  %s4 = sld [smem:[#allocation0]]
  $region57: #{tpu_custom_call.1} parent=0
    _
  %s6 = ssub.s32 1, %s4
  %s7 = scalar_select 0, %s6, %s4
  $region1: #{tpu_custom_call.1} parent=0
    #allocation2 [shape = 'u8[8192]{0}', space=vmem, size = 0x2000, scoped, tag = 'input window, operand 0']
    #allocation3 [shape = 's32[2]{0}', space=sflag, size = 0x8, scoped, tag = 'scoped memory for tpu_custom_call.1']
    #allocation4 [shape = 's32[2]{0}', space=sflag, size = 0x8, scoped, tag = 'scoped memory for tpu_custom_call.1']
    #allocation5 [shape = 'u8[8192]{0}', space=vmem, size = 0x2000, scoped, tag = 'input window, operand 1']
    #allocation6 [shape = 's32[2]{0}', space=sflag, size = 0x8, scoped, tag = 'scoped memory for tpu_custom_call.1']
    #allocation7 [shape = 'u8[2048]{0}', space=vmem, size = 0x800, scoped, tag = 'input window, operand 2']
    #allocation8 [shape = 'u8[8192]{0}', space=vmem, size = 0x2000, scoped, tag = 'output window, operand 0']
    %8 = vsyncpa [#allocation3], 0
    %s9 = scalar_lea.sflag [#allocation3], 1
    %10 = vsyncpa %s9, 0
    %11 = vsyncpa [#allocation6], 0
    %s12 = scalar_lea.sflag [#allocation6], 1
    %13 = vsyncpa %s12, 0
    %14 = vsyncpa [#allocation4], 0
    %s15 = scalar_lea.sflag [#allocation4], 1
    %16 = vsyncpa %s15, 0
    loop: start=0, step=1, limit=4
    $region2: #{tpu_custom_call.1} parent=1 // loop_pre_header
      _
    $region3: #{tpu_custom_call.1} parent=1 // loop_header
      %s18 = sphi 0, %s22
      %p19 = scmp.ge.s32.totalorder %s18, 4
      %s25 = sphi 0, %s37
      %s26 = sphi 0, %s33
      %s27 = sphi 0, %s25
      %s28 = sphi 0, %s26
      %s29 = sphi 0, %s27
      %s30 = sphi 0, %s28
      %s42 = sphi 0, %s44
      %s45 = sphi 0, %s42
      %s46 = sphi 0, %s45
      %s62 = sphi 0, %s46
      %s70 = sphi 0, %s72
      %s73 = sphi 0, %s70
      %s74 = sphi 0, %s73
      %s90 = sphi 0, %s74
      %s96 = sphi 0, %s98
      %s99 = sphi 0, %s96
      %s100 = sphi 0, %s99
      %s116 = sphi 0, %s100
      %s124 = sphi 0, %s126
      %s127 = sphi 0, %s124
      %s128 = sphi 0, %s127
      %s144 = sphi 0, %s128
    $region4: #{tpu_custom_call.1} parent=1 // loop_header_branch
      %21 = sbr.rel (%p19) target = $region8
    $region5: #{tpu_custom_call.1} parent=1 // loop_body
      %s23 = ssub.s32 %s18, 1
      %s24 = ssub.s32 %s18, 2
      %s31 = sadd.s32 1, %s26
      %p32 = scmp.ge.s32.totalorder %s31, 1
      %s33 = scalar_select %p32, 0, %s31
      %s34 = sadd.s32 1, %s25
      %s35 = scalar_select %p32, %s34, %s25
      %p36 = scmp.ge.s32.totalorder %s35, 2
      %s37 = scalar_select %p36, 0, %s35
      %s38 = ssub.s32 %s25, %s37
      %s39 = ssub.s32 %s26, %s33
      %s40 = sor.u32 %s38, %s39
      %p41 = scmp.eq.s32.totalorder %s40, 0
      %s43 = sadd.s32 %s42, 1
      %s44 = scalar_select %p41, %s42, %s43
      %p47 = pneg %p41
      %p48 = scmp.eq.s32.totalorder %s18, 1
      %p49 = por %p47, %p48
      %p50 = scmp.ne.s32.totalorder %s42, %s45
      %p51 = scmp.eq.s32.totalorder %s18, 0
      %p52 = por %p50, %p51
      %p53 = scmp.ne.s32.totalorder %s42, %s45
      %p54 = scmp.eq.s32.totalorder %s23, 1
      %p55 = por %p53, %p54
      %p56 = scmp.ne.s32.totalorder %s45, %s46
      %p57 = scmp.eq.s32.totalorder %s23, 0
      %p58 = por %p56, %p57
      %p59 = scmp.ne.s32.totalorder %s45, %s46
      %p60 = scmp.eq.s32.totalorder %s24, 1
      %p61 = por %p59, %p60
      %p63 = scmp.ne.s32.totalorder %s46, %s62
      %p64 = scmp.eq.s32.totalorder %s24, 0
      %p65 = por %p63, %p64
      %s66 = ssub.s32 %s25, %s37
      %s67 = ssub.s32 %s26, %s33
      %s68 = sor.u32 %s66, %s67
      %p69 = scmp.eq.s32.totalorder %s68, 0
      %s71 = sadd.s32 %s70, 1
      %s72 = scalar_select %p69, %s70, %s71
      %p75 = pneg %p69
      %p76 = scmp.eq.s32.totalorder %s18, 1
      %p77 = por %p75, %p76
      %p78 = scmp.ne.s32.totalorder %s70, %s73
      %p79 = scmp.eq.s32.totalorder %s18, 0
      %p80 = por %p78, %p79
      %p81 = scmp.ne.s32.totalorder %s70, %s73
      %p82 = scmp.eq.s32.totalorder %s23, 1
      %p83 = por %p81, %p82
      %p84 = scmp.ne.s32.totalorder %s73, %s74
      %p85 = scmp.eq.s32.totalorder %s23, 0
      %p86 = por %p84, %p85
      %p87 = scmp.ne.s32.totalorder %s73, %s74
      %p88 = scmp.eq.s32.totalorder %s24, 1
      %p89 = por %p87, %p88
      %p91 = scmp.ne.s32.totalorder %s74, %s90
      %p92 = scmp.eq.s32.totalorder %s24, 0
      %p93 = por %p91, %p92
      %s94 = ssub.s32 %s25, %s37
      %p95 = scmp.eq.s32.totalorder %s94, 0
      %s97 = sadd.s32 %s96, 1
      %s98 = scalar_select %p95, %s96, %s97
      %p101 = pneg %p95
      %p102 = scmp.eq.s32.totalorder %s18, 1
      %p103 = por %p101, %p102
      %p104 = scmp.ne.s32.totalorder %s96, %s99
      %p105 = scmp.eq.s32.totalorder %s18, 0
      %p106 = por %p104, %p105
      %p107 = scmp.ne.s32.totalorder %s96, %s99
      %p108 = scmp.eq.s32.totalorder %s23, 1
      %p109 = por %p107, %p108
      %p110 = scmp.ne.s32.totalorder %s99, %s100
      %p111 = scmp.eq.s32.totalorder %s23, 0
      %p112 = por %p110, %p111
      %p113 = scmp.ne.s32.totalorder %s99, %s100
      %p114 = scmp.eq.s32.totalorder %s24, 1
      %p115 = por %p113, %p114
      %p117 = scmp.ne.s32.totalorder %s100, %s116
      %p118 = scmp.eq.s32.totalorder %s24, 0
      %p119 = por %p117, %p118
      %s120 = ssub.s32 %s25, %s37
      %s121 = ssub.s32 %s26, %s33
      %s122 = sor.u32 %s120, %s121
      %p123 = scmp.eq.s32.totalorder %s122, 0
      %s125 = sadd.s32 %s124, 1
      %s126 = scalar_select %p123, %s124, %s125
      %p129 = pneg %p123
      %p130 = scmp.eq.s32.totalorder %s18, 1
      %p131 = por %p129, %p130
      %p132 = scmp.ne.s32.totalorder %s124, %s127
      %p133 = scmp.eq.s32.totalorder %s18, 0
      %p134 = por %p132, %p133
      %p135 = scmp.ne.s32.totalorder %s124, %s127
      %p136 = scmp.eq.s32.totalorder %s23, 1
      %p137 = por %p135, %p136
      %p138 = scmp.ne.s32.totalorder %s127, %s128
      %p139 = scmp.eq.s32.totalorder %s23, 0
      %p140 = por %p138, %p139
      %p141 = scmp.ne.s32.totalorder %s127, %s128
      %p142 = scmp.eq.s32.totalorder %s24, 1
      %p143 = por %p141, %p142
      %p145 = scmp.ne.s32.totalorder %s128, %s144
      %p146 = scmp.eq.s32.totalorder %s24, 0
      %p147 = por %p145, %p146
      %p148 = scmp.le.s32.totalorder 1, %s18
      %p149 = scmp.lt.s32.totalorder %s18, 3
      %p150 = pnand %p148, %p149
      %p151 = pneg %p150
      // Predicated region
      $region9: #{tpu_custom_call.1} parent=5 // pred_check
        _
      $region10: #{tpu_custom_call.1} parent=5 // pred_check_branch
        %153 = sbr.rel (%p150) target = $region12
      $region11: #{tpu_custom_call.1} parent=5 // pred_region
        %s154 = ssub.s32 %s18, 1
      $region12: #{tpu_custom_call.1} parent=5 // pred_fallthru
        _
      %p155 = scmp.lt.s32.totalorder %s18, 2
      // Predicated region
      $region13: #{tpu_custom_call.1} parent=5 // pred_check
        %p156 = pneg %p155
      $region14: #{tpu_custom_call.1} parent=5 // pred_check_branch
        %158 = sbr.rel (%p156) target = $region16
      $region15: #{tpu_custom_call.1} parent=5 // pred_region
        // Predicated region
        $region17: #{tpu_custom_call.1} parent=15 // pred_check
          %p159 = pneg %p52
        $region18: #{tpu_custom_call.1} parent=15 // pred_check_branch
          %161 = sbr.rel (%p159) target = $region20
        $region19: #{tpu_custom_call.1} parent=15 // pred_region
          %s162 = sand.u32 %s42, 1
          %s163 = scalar_lea.sflag [#allocation3], %s162
          %s164 = sand.u32 %s42, 1
          %s165 = smul.addr %s164, 8
          %s166 = scalar_lea.vmem [#allocation2], %s165
          %s168 = ssub.s32 128, 128
          %169 = vsyncadd %s163, %s168
          %s170 = smul.addr %s26, 2
          %s171 = smul.addr %s25, 2
          %s172 = sadd.s32 %s170, %s171
          %s173 = smul.addr %s172, 64
          %s174 = scalar_lea.hbm %s0, %s173
          %s176 = sshll.u32 %s166, 4
          %s177 = int_to_ptr.vmem [resolvable:$true] %s176
          %179 = dma.hbm_to_vmem [thread:$0]  %s174, 128, %s177, %s163
        $region20: #{tpu_custom_call.1} parent=15 // pred_fallthru
          _
        // Predicated region
        $region21: #{tpu_custom_call.1} parent=15 // pred_check
          %p180 = pneg %p80
        $region22: #{tpu_custom_call.1} parent=15 // pred_check_branch
          %182 = sbr.rel (%p180) target = $region24
        $region23: #{tpu_custom_call.1} parent=15 // pred_region
          %s183 = sand.u32 %s18, 1
          %s184 = scalar_lea.sflag [#allocation6], %s183
          %s185 = sand.u32 %s70, 1
          %s186 = smul.addr %s185, 8
          %s187 = scalar_lea.vmem [#allocation5], %s186
          %s189 = ssub.s32 128, 128
          %190 = vsyncadd %s184, %s189
          %s191 = smul.addr %s26, 2
          %s192 = smul.addr %s25, 2
          %s193 = sadd.s32 %s191, %s192
          %s194 = smul.addr %s193, 64
          %s195 = scalar_lea.hbm %s1, %s194
          %s197 = sshll.u32 %s187, 4
          %s198 = int_to_ptr.vmem [resolvable:$true] %s197
          %200 = dma.hbm_to_vmem [thread:$0]  %s195, 128, %s198, %s184
        $region24: #{tpu_custom_call.1} parent=15 // pred_fallthru
          _
        // Predicated region
        $region25: #{tpu_custom_call.1} parent=15 // pred_check
          %p201 = pneg %p106
        $region26: #{tpu_custom_call.1} parent=15 // pred_check_branch
          %203 = sbr.rel (%p201) target = $region28
        $region27: #{tpu_custom_call.1} parent=15 // pred_region
          %s204 = sand.u32 %s18, 1
          %s205 = scalar_lea.sflag [#allocation6], %s204
          %s206 = sand.u32 %s96, 1
          %s207 = smul.addr %s206, 2
          %s208 = scalar_lea.vmem [#allocation7], %s207
          %s210 = ssub.s32 32, 32
          %211 = vsyncadd %s205, %s210
          %s212 = smul.addr %s25, 2
          %s213 = smul.addr %s212, 16
          %s214 = scalar_lea.hbm %s2, %s213
          %s216 = sshll.u32 %s208, 4
          %s217 = int_to_ptr.vmem [resolvable:$true] %s216
          %219 = dma.hbm_to_vmem [thread:$0]  %s214, 32, %s217, %s205
        $region28: #{tpu_custom_call.1} parent=15 // pred_fallthru
          _
      $region16: #{tpu_custom_call.1} parent=5 // pred_fallthru
        _
      %p220 = scmp.le.s32.totalorder 1, %s18
      %p221 = scmp.lt.s32.totalorder %s18, 3
      %p222 = pnand %p220, %p221
      %p223 = pneg %p222
      // Predicated region
      $region29: #{tpu_custom_call.1} parent=5 // pred_check
        _
      $region30: #{tpu_custom_call.1} parent=5 // pred_check_branch
        %225 = sbr.rel (%p222) target = $region32
      $region31: #{tpu_custom_call.1} parent=5 // pred_region
        %s226 = ssub.s32 %s18, 1
        %s227 = sand.u32 %s45, 1
        %s228 = scalar_lea.sflag [#allocation3], %s227
        %s229 = sand.u32 %s45, 1
        %s230 = smul.addr %s229, 8
        %s231 = scalar_lea.vmem [#allocation2], %s230
        // Predicated region
        $region33: #{tpu_custom_call.1} parent=31 // pred_check
          %p232 = pneg %p58
        $region34: #{tpu_custom_call.1} parent=31 // pred_check_branch
          %234 = sbr.rel (%p232) target = $region36
        $region35: #{tpu_custom_call.1} parent=31 // pred_region
          %235 = dma.done %s228, 128
        $region36: #{tpu_custom_call.1} parent=31 // pred_fallthru
          _
        %s236 = sand.u32 %s23, 1
        %s237 = scalar_lea.sflag [#allocation6], %s236
        %s238 = sand.u32 %s73, 1
        %s239 = smul.addr %s238, 8
        %s240 = scalar_lea.vmem [#allocation5], %s239
        // Predicated region
        $region37: #{tpu_custom_call.1} parent=31 // pred_check
          %p241 = pneg %p86
        $region38: #{tpu_custom_call.1} parent=31 // pred_check_branch
          %243 = sbr.rel (%p241) target = $region40
        $region39: #{tpu_custom_call.1} parent=31 // pred_region
          %244 = dma.done %s237, 128
        $region40: #{tpu_custom_call.1} parent=31 // pred_fallthru
          _
        %s245 = sand.u32 %s23, 1
        %s246 = scalar_lea.sflag [#allocation6], %s245
        %s247 = sand.u32 %s99, 1
        %s248 = smul.addr %s247, 2
        %s249 = scalar_lea.vmem [#allocation7], %s248
        // Predicated region
        $region41: #{tpu_custom_call.1} parent=31 // pred_check
          %p250 = pneg %p112
        $region42: #{tpu_custom_call.1} parent=31 // pred_check_branch
          %252 = sbr.rel (%p250) target = $region44
        $region43: #{tpu_custom_call.1} parent=31 // pred_region
          %253 = dma.done %s246, 32
        $region44: #{tpu_custom_call.1} parent=31 // pred_fallthru
          _
        %s254 = sand.u32 %s45, 1
        %s255 = scalar_lea.sflag [#allocation3], %s254
        %s256 = sand.u32 %s45, 1
        %s257 = smul.addr %s256, 8
        %s258 = scalar_lea.vmem [#allocation2], %s257
        %p259 = pneg %p58
        %p260 = pneg %p55
        %s261 = sand.u32 %s23, 1
        %s262 = scalar_lea.sflag [#allocation6], %s261
        %s263 = sand.u32 %s73, 1
        %s264 = smul.addr %s263, 8
        %s265 = scalar_lea.vmem [#allocation5], %s264
        %p266 = pneg %p86
        %p267 = pneg %p83
        %s268 = sand.u32 %s23, 1
        %s269 = scalar_lea.sflag [#allocation6], %s268
        %s270 = sand.u32 %s99, 1
        %s271 = smul.addr %s270, 2
        %s272 = scalar_lea.vmem [#allocation7], %s271
        %p273 = pneg %p112
        %p274 = pneg %p109
        %p275 = pneg %p140
        %p276 = pneg %p137
        %s277 = sand.u32 %s127, 1
        %s278 = scalar_lea.sflag [#allocation4], %s277
        %s279 = sand.u32 %s127, 1
        %s280 = smul.addr %s279, 8
        %s281 = scalar_lea.vmem [#allocation8], %s280
        %v282 = vld [vmem:[%s231] sm:$0xff]
        %v283 = vld [vmem:[%s240] sm:$0xff]
        %v284 = vld [vmem:[%s249] sm:$0x3]
        %v285 = vsub.f32 %v283, %v282
        %v287 = vlaneseq
        %v288 = vshrl.u32 %v287, 7
        %v289 = vsub.s32 0, %v288
        %v290 = vrot.slane %v284, %v289
        %v291 = vlaneseq
        %v292 = vshrl.u32 %v291, 7
        %v293 = vsub.s32 1, %v292
        %v294 = vrot.slane %v284, %v293
        %v298 = vcombine.high %v285, %v285
        %v300 = vmul.f32 %v290, %v285
        %v301 = vmul.f32 %v294, %v298
        %v304 = vcombine.low %v300, %v301
        %v306 = vadd.f32 %v282, %v304
        %307 = vst [vmem:[%s281] sm:$0xff] %v306
        %s308 = sand.u32 %s127, 1
        %s309 = scalar_lea.sflag [#allocation4], %s308
        %s310 = sand.u32 %s127, 1
        %s311 = smul.addr %s310, 8
        %s312 = scalar_lea.vmem [#allocation8], %s311
        // Predicated region
        $region45: #{tpu_custom_call.1} parent=31 // pred_check
          %p313 = pneg %p137
        $region46: #{tpu_custom_call.1} parent=31 // pred_check_branch
          %315 = sbr.rel (%p313) target = $region48
        $region47: #{tpu_custom_call.1} parent=31 // pred_region
          %s317 = ssub.s32 128, 128
          %318 = vsyncadd %s309, %s317
          %s319 = smul.addr %s28, 2
          %s320 = smul.addr %s27, 2
          %s321 = sadd.s32 %s319, %s320
          %s322 = smul.addr %s321, 64
          %s323 = scalar_lea.hbm %s3, %s322
          %s325 = sshll.u32 %s312, 4
          %s326 = int_to_ptr.vmem [resolvable:$true] %s325
          %328 = dma.vmem_to_hbm [thread:$0]  %s326, 128, %s323, %s309
        $region48: #{tpu_custom_call.1} parent=31 // pred_fallthru
          _
      $region32: #{tpu_custom_call.1} parent=5 // pred_fallthru
        _
      %p329 = scmp.le.s32.totalorder 2, %s18
      // Predicated region
      $region49: #{tpu_custom_call.1} parent=5 // pred_check
        %p330 = pneg %p329
      $region50: #{tpu_custom_call.1} parent=5 // pred_check_branch
        %332 = sbr.rel (%p330) target = $region52
      $region51: #{tpu_custom_call.1} parent=5 // pred_region
        %s333 = ssub.s32 %s18, 2
        // Predicated region
        $region53: #{tpu_custom_call.1} parent=51 // pred_check
          %p334 = pneg %p143
        $region54: #{tpu_custom_call.1} parent=51 // pred_check_branch
          %336 = sbr.rel (%p334) target = $region56
        $region55: #{tpu_custom_call.1} parent=51 // pred_region
          %s337 = sand.u32 %s128, 1
          %s338 = scalar_lea.sflag [#allocation4], %s337
          %s339 = sand.u32 %s128, 1
          %s340 = smul.addr %s339, 8
          %s341 = scalar_lea.vmem [#allocation8], %s340
          %342 = dma.done %s338, 128
        $region56: #{tpu_custom_call.1} parent=51 // pred_fallthru
          _
      $region52: #{tpu_custom_call.1} parent=5 // pred_fallthru
        _
    $region6: #{tpu_custom_call.1} parent=1 // loop_footer
      %s22 = sadd.s32 1, %s18
    $region7: #{tpu_custom_call.1} parent=1 // loop_footer_branch
      %17 = sbr.rel target = $region3
    $region8: #{tpu_custom_call.1} parent=1 // loop_exit
      _
    %343 = vsyncpa [#allocation3], 1
    %s344 = scalar_lea.sflag [#allocation3], 1
    %345 = vsyncpa %s344, 1
    %346 = vsyncpa [#allocation6], 1
    %s347 = scalar_lea.sflag [#allocation6], 1
    %348 = vsyncpa %s347, 1
    %349 = vsyncpa [#allocation4], 1
    %s350 = scalar_lea.sflag [#allocation4], 1
    %351 = vsyncpa %s350, 1

</llo_original>
